<compile_context>
chip_gen: v5e
topology: v5e:2x2
jax: 0.10.0
libtpu: 0.0.40
codegen_flags: <defaults>
</compile_context>

<pallas_src>
import jax
import jax.numpy as jnp
from jax.experimental import pallas as pl
from jax.experimental.pallas import tpu as pltpu


def _bilinear_matrix(in_size: int, out_size: int) -> jnp.ndarray:
    """Interpolation matrix A (out_size, in_size) for align_corners=True bilinear."""
    if out_size == 1:
        src = jnp.zeros((1,), jnp.float32)
    else:
        src = jnp.arange(out_size, dtype=jnp.float32) * (
            (in_size - 1) / (out_size - 1)
        )
    i0 = jnp.clip(jnp.floor(src).astype(jnp.int32), 0, in_size - 1)
    i1 = jnp.clip(i0 + 1, 0, in_size - 1)
    frac = src - i0.astype(jnp.float32)
    eye = jnp.eye(in_size, dtype=jnp.float32)
    return eye[i0] * (1.0 - frac)[:, None] + eye[i1] * frac[:, None]


def _up_kernel(x_ref, w_ref, kt_ref, b_ref, o_ref):
    # x_ref : (Cin, N*H*W)          VMEM  (batch+spatial flattened into lanes)
    # w_ref : (Cout, Cin)           VMEM  (1x1 conv weights)
    # kt_ref: (H*W, Hout*Wout)      VMEM  ((Ah ⊗ Aw)^T, bilinear upsample matrix)
    # b_ref : (Cout, 1)             VMEM  (conv bias, broadcast once per sample)
    # o_ref : (N, Cout, Hout*Wout)  lane-dense output (reshaped to NCHW in wrapper)
    n_batch = o_ref.shape[0]
    hw = kt_ref.shape[0]

    x = x_ref[...].astype(jnp.float32)
    w = w_ref[...]
    kt = kt_ref[...]
    bias = b_ref[...]                                             # (Cout, 1)

    # 1x1 conv first (it commutes with the per-channel linear upsample):
    # one MXU matmul covering every batch element.
    mixed = jnp.dot(w, x, preferred_element_type=jnp.float32)     # (Cout, N*H*W)

    # Bilinear upsample: one MXU matmul per sample against the Kronecker matrix.
    # N is small, so this static loop fully unrolls; each matmul has K = H*W = 256
    # and a 1024-wide lane-dense result.
    for ni in range(n_batch):
        blk = mixed[:, ni * hw:(ni + 1) * hw]                     # (Cout, H*W)
        up = jnp.dot(blk, kt, preferred_element_type=jnp.float32) + bias
        o_ref[ni] = up.astype(o_ref.dtype)                        # (Cout, Hout*Wout)


def up_forward(x_nchw, weight, bias, scale_factor=2):
    """UP.forward: bilinear upsample (align_corners=True) then 1x1 conv. NCHW in/out."""
    n, cin, h, w = x_nchw.shape
    cout = weight.shape[0]
    hout, wout = h * scale_factor, w * scale_factor
    hw, hwout = h * w, hout * wout

    # Host-side (XLA) prep: constant interpolation matrices + layout plumbing.
    ah = _bilinear_matrix(h, hout)                                # (Hout, H)
    aw = _bilinear_matrix(w, wout)                                # (Wout, W)
    kt = jnp.kron(ah, aw).T.astype(jnp.float32)                   # (H*W, Hout*Wout)
    x_flat = x_nchw.transpose(1, 0, 2, 3).reshape(cin, n * hw)    # (Cin, N*H*W)
    w2d = weight.reshape(cout, cin).astype(jnp.float32)
    b_col = bias.astype(jnp.float32).reshape(cout, 1)

    out_flat = pl.pallas_call(
        _up_kernel,
        out_shape=jax.ShapeDtypeStruct((n, cout, hwout), x_nchw.dtype),
        grid=(1,),
        in_specs=[
            pl.BlockSpec((cin, n * hw), lambda i: (0, 0)),
            pl.BlockSpec((cout, cin), lambda i: (0, 0)),
            pl.BlockSpec((hw, hwout), lambda i: (0, 0)),
            pl.BlockSpec((cout, 1), lambda i: (0, 0)),
        ],
        out_specs=pl.BlockSpec((n, cout, hwout), lambda i: (0, 0, 0)),
        compiler_params=pltpu.CompilerParams(
            dimension_semantics=("arbitrary",)),
    )(x_flat, w2d, kt, b_col)

    return out_flat.reshape(n, cout, hout, wout)


def up_reference(x_nchw, weight, bias, scale_factor=2):
    """Pure-JAX reference for validation (upsample-then-conv, like the PyTorch module)."""
    n, cin, h, w = x_nchw.shape
    cout = weight.shape[0]
    ah = _bilinear_matrix(h, h * scale_factor)
    aw = _bilinear_matrix(w, w * scale_factor)
    up = jnp.einsum("ph,nchw->ncpw", ah, x_nchw.astype(jnp.float32))
    up = jnp.einsum("qw,ncpw->ncpq", aw, up)
    wmat = weight.reshape(cout, cin).astype(jnp.float32)
    out = jnp.einsum("oc,ncpq->nopq", wmat, up) + bias[None, :, None, None]
    return out.astype(x_nchw.dtype)


if __name__ == "__main__":
    # Small shapes consistent with the module: N=2, in_channels=4, out_channels=2, 16x16 spatial.
    N, CIN, COUT, H, W = 2, 4, 2, 16, 16
    key = jax.random.PRNGKey(0)
    kx, kw, kb = jax.random.split(key, 3)

    x = jax.random.normal(kx, (N, CIN, H, W), dtype=jnp.float32)

    # Deterministic Conv2d(1x1) param init (uniform in +-1/sqrt(fan_in), like PyTorch default).
    fan_in = CIN * 1 * 1
    bound = 1.0 / (fan_in ** 0.5)
    weight = jax.random.uniform(kw, (COUT, CIN, 1, 1), jnp.float32, -bound, bound)
    bias = jax.random.uniform(kb, (COUT,), jnp.float32, -bound, bound)

    out = up_forward(x, weight, bias, scale_factor=2)
    out = jax.block_until_ready(out)

    ref = up_reference(x, weight, bias, scale_factor=2)
    assert out.shape == (N, COUT, 2 * H, 2 * W), out.shape
    assert jnp.allclose(out, ref, atol=1e-4, rtol=1e-4), float(jnp.abs(out - ref).max())

    print("KERNEL_OK")
</pallas_src>

<mosaic_0001>
module attributes {stable_mosaic.version = 11 : i64} {
  func.func @_up_kernel(%arg0: i32, %arg1: memref<4x512xf32, #tpu.memory_space<vmem>>, %arg2: memref<2x4xf32, #tpu.memory_space<vmem>>, %arg3: memref<256x1024xf32, #tpu.memory_space<vmem>>, %arg4: memref<2x1xf32, #tpu.memory_space<vmem>>, %arg5: memref<2x2x1024xf32, #tpu.memory_space<vmem>>) attributes {dimension_semantics = [#tpu.dimension_semantics<arbitrary>], iteration_bounds = array<i64: 1>, scalar_prefetch = 0 : i64, scratch_operands = 0 : i64, tpu.core_type = #tpu.core_type<tc>, window_params = [{pipeline_mode = #tpu.pipeline_mode<synchronous>, transform_indices = @transform_0, window_bounds = array<i64: 4, 512>}, {pipeline_mode = #tpu.pipeline_mode<synchronous>, transform_indices = @transform_1, window_bounds = array<i64: 2, 4>}, {pipeline_mode = #tpu.pipeline_mode<synchronous>, transform_indices = @transform_2, window_bounds = array<i64: 256, 1024>}, {pipeline_mode = #tpu.pipeline_mode<synchronous>, transform_indices = @transform_3, window_bounds = array<i64: 2, 1>}, {pipeline_mode = #tpu.pipeline_mode<synchronous>, transform_indices = @transform_4, window_bounds = array<i64: 2, 2, 1024>}]} {
    %c0 = arith.constant 0 : index
    %c0_0 = arith.constant 0 : index
    %0 = vector.load %arg1[%c0, %c0_0] : memref<4x512xf32, #tpu.memory_space<vmem>>, vector<4x512xf32>
    %c0_1 = arith.constant 0 : index
    %c0_2 = arith.constant 0 : index
    %1 = vector.load %arg2[%c0_1, %c0_2] : memref<2x4xf32, #tpu.memory_space<vmem>>, vector<2x4xf32>
    %c0_3 = arith.constant 0 : index
    %c0_4 = arith.constant 0 : index
    %2 = vector.load %arg3[%c0_3, %c0_4] : memref<256x1024xf32, #tpu.memory_space<vmem>>, vector<256x1024xf32>
    %c0_5 = arith.constant 0 : index
    %c0_6 = arith.constant 0 : index
    %3 = vector.load %arg4[%c0_5, %c0_6] : memref<2x1xf32, #tpu.memory_space<vmem>>, vector<2x1xf32>
    %cst = arith.constant dense<0.000000e+00> : vector<2x512xf32>
    %4 = tpu.matmul %1, %0, %cst {dimension_numbers = #tpu.dot_dimension_numbers<[1], [0], [0], [1], [0, 0, 1, 1], [], []>} : vector<2x4xf32>, vector<4x512xf32>, vector<2x512xf32> -> vector<2x512xf32>
    %5 = vector.extract_strided_slice %4 {offsets = [0, 0], sizes = [2, 256], strides = [1, 1]} : vector<2x512xf32> to vector<2x256xf32>
    %cst_7 = arith.constant dense<0.000000e+00> : vector<2x1024xf32>
    %6 = tpu.matmul %5, %2, %cst_7 {dimension_numbers = #tpu.dot_dimension_numbers<[1], [0], [0], [1], [0, 0, 1, 1], [], []>} : vector<2x256xf32>, vector<256x1024xf32>, vector<2x1024xf32> -> vector<2x1024xf32>
    %7 = vector.broadcast %3 : vector<2x1xf32> to vector<2x1024xf32>
    %8 = arith.addf %6, %7 : vector<2x1024xf32>
    %c0_8 = arith.constant 0 : index
    %c0_9 = arith.constant 0 : index
    %c0_10 = arith.constant 0 : index
    %9 = vector.load %arg5[%c0_8, %c0_9, %c0_10] : memref<2x2x1024xf32, #tpu.memory_space<vmem>>, vector<1x2x1024xf32>
    %10 = vector.shape_cast %9 : vector<1x2x1024xf32> to vector<2x1024xf32>
    %11 = vector.shape_cast %8 : vector<2x1024xf32> to vector<1x2x1024xf32>
    tpu.vector_store %arg5[%c0_8, %c0_9, %c0_10], %11 {strides = array<i32>} : memref<2x2x1024xf32, #tpu.memory_space<vmem>>, vector<1x2x1024xf32>,
    %12 = vector.extract_strided_slice %4 {offsets = [0, 256], sizes = [2, 256], strides = [1, 1]} : vector<2x512xf32> to vector<2x256xf32>
    %cst_11 = arith.constant dense<0.000000e+00> : vector<2x1024xf32>
    %13 = tpu.matmul %12, %2, %cst_11 {dimension_numbers = #tpu.dot_dimension_numbers<[1], [0], [0], [1], [0, 0, 1, 1], [], []>} : vector<2x256xf32>, vector<256x1024xf32>, vector<2x1024xf32> -> vector<2x1024xf32>
    %14 = vector.broadcast %3 : vector<2x1xf32> to vector<2x1024xf32>
    %15 = arith.addf %13, %14 : vector<2x1024xf32>
    %c1 = arith.constant 1 : index
    %c0_12 = arith.constant 0 : index
    %c0_13 = arith.constant 0 : index
    %16 = vector.load %arg5[%c1, %c0_12, %c0_13] : memref<2x2x1024xf32, #tpu.memory_space<vmem>>, vector<1x2x1024xf32>
    %17 = vector.shape_cast %16 : vector<1x2x1024xf32> to vector<2x1024xf32>
    %18 = vector.shape_cast %15 : vector<2x1024xf32> to vector<1x2x1024xf32>
    tpu.vector_store %arg5[%c1, %c0_12, %c0_13], %18 {strides = array<i32>} : memref<2x2x1024xf32, #tpu.memory_space<vmem>>, vector<1x2x1024xf32>,
    return
  }
  func.func @transform_0(%arg0: i32) -> (i32, i32) {
    %c0_i32 = arith.constant 0 : i32
    %c0_i32_0 = arith.constant 0 : i32
    %c0_i32_1 = arith.constant 0 : i32
    return %c0_i32, %c0_i32_0 : i32, i32
  }
  func.func @transform_1(%arg0: i32) -> (i32, i32) {
    %c0_i32 = arith.constant 0 : i32
    %c0_i32_0 = arith.constant 0 : i32
    %c0_i32_1 = arith.constant 0 : i32
    return %c0_i32, %c0_i32_0 : i32, i32
  }
  func.func @transform_2(%arg0: i32) -> (i32, i32) {
    %c0_i32 = arith.constant 0 : i32
    %c0_i32_0 = arith.constant 0 : i32
    %c0_i32_1 = arith.constant 0 : i32
    return %c0_i32, %c0_i32_0 : i32, i32
  }
  func.func @transform_3(%arg0: i32) -> (i32, i32) {
    %c0_i32 = arith.constant 0 : i32
    %c0_i32_0 = arith.constant 0 : i32
    %c0_i32_1 = arith.constant 0 : i32
    return %c0_i32, %c0_i32_0 : i32, i32
  }
  func.func @transform_4(%arg0: i32) -> (i32, i32, i32) {
    %c0_i32 = arith.constant 0 : i32
    %c0_i32_0 = arith.constant 0 : i32
    %c0_i32_1 = arith.constant 0 : i32
    %c0_i32_2 = arith.constant 0 : i32
    return %c0_i32, %c0_i32_0, %c0_i32_1 : i32, i32, i32
  }
}

</mosaic_0001>

<llo_original>
// kernel: tpu_custom_call.1
$region0: #{tpu_custom_call.1}
  #allocation0 [shape = 'u32[]', space=smem, size = 0x4, offset = 0x4, fixed_abs, tag = 'smem constant byte address 0x4 - core index']
  #allocation1 [shape = 'u32[72,128]{1,0:T(1,128)}', space=vmem, size = 0x9000, scoped, tag = 'internal scratch']
  %s0 = inlined_call_operand.hbm [shape: f32[4,512], index: 0, kind: input, shape index: {}]
  %s1 = inlined_call_operand.vmem [shape: f32[2,4], index: 1, kind: input, shape index: {}]
  %s2 = inlined_call_operand.hbm [shape: f32[256,1024], index: 2, kind: input, shape index: {}]
  %s3 = inlined_call_operand.vmem [shape: f32[2,1], index: 3, kind: input, shape index: {}]
  %s4 = inlined_call_operand.hbm [shape: f32[2,2,1024], index: 4, kind: output, shape index: {}]
  %s5 = sld [smem:[#allocation0]]
  $region34: #{tpu_custom_call.1} parent=0
    _
  %s7 = ssub.s32 1, %s5
  %s8 = scalar_select 0, %s7, %s5
  $region1: #{tpu_custom_call.1} parent=0
    #allocation2 [shape = 'u8[8192]{0}', space=vmem, size = 0x2000, scoped, tag = 'input window, operand 0, single buffered']
    #allocation3 [shape = 's32[1]{0}', space=sflag, size = 0x4, scoped, tag = 'scoped memory for tpu_custom_call.1']
    #allocation4 [shape = 's32[1]{0}', space=sflag, size = 0x4, scoped, tag = 'scoped memory for tpu_custom_call.1']
    #allocation5 [shape = 'u8[1048576]{0}', space=vmem, size = 0x100000, scoped, tag = 'input window, operand 2, single buffered']
    #allocation6 [shape = 's32[1]{0}', space=sflag, size = 0x4, scoped, tag = 'scoped memory for tpu_custom_call.1']
    #allocation7 [shape = 'u8[16384]{0}', space=vmem, size = 0x4000, scoped, tag = 'output window, operand 0, single buffered']
    %9 = vsyncpa [#allocation3], 0
    %10 = vsyncpa [#allocation6], 0
    %11 = vsyncpa [#allocation4], 0
    // Predicated region
    $region2: #{tpu_custom_call.1} parent=1 // pred_check
      _
    $region3: #{tpu_custom_call.1} parent=1 // pred_check_branch
      %13 = sbr.rel (0) target = $region5
    $region4: #{tpu_custom_call.1} parent=1 // pred_region
      %15 = vsyncadd [#allocation3], 0
      %s17 = sshll.u32 %s0, 4
      %s18 = int_to_ptr.hbm [resolvable:$true] %s17
      %s19 = sshll.u32 [#allocation2], 4
      %s20 = int_to_ptr.vmem [resolvable:$true] %s19
      %22 = dma.hbm_to_vmem [thread:$0]  %s18, 256, %s20, [#allocation3]
    $region5: #{tpu_custom_call.1} parent=1 // pred_fallthru
      _
    // Predicated region
    $region6: #{tpu_custom_call.1} parent=1 // pred_check
      _
    $region7: #{tpu_custom_call.1} parent=1 // pred_check_branch
      %24 = sbr.rel (0) target = $region9
    $region8: #{tpu_custom_call.1} parent=1 // pred_region
      _
    $region9: #{tpu_custom_call.1} parent=1 // pred_fallthru
      _
    // Predicated region
    $region10: #{tpu_custom_call.1} parent=1 // pred_check
      _
    $region11: #{tpu_custom_call.1} parent=1 // pred_check_branch
      %26 = sbr.rel (0) target = $region13
    $region12: #{tpu_custom_call.1} parent=1 // pred_region
      %28 = vsyncadd [#allocation6], 0
      %s29 = sshll.u32 %s2, 4
      %s30 = int_to_ptr.hbm [resolvable:$true] %s29
      %s31 = sshll.u32 [#allocation5], 4
      %s32 = int_to_ptr.vmem [resolvable:$true] %s31
      %37 = dma.hbm_to_vmem [thread:$0]  %s30, 32768, %s32, [#allocation6], 1024, 1024, 64
    $region13: #{tpu_custom_call.1} parent=1 // pred_fallthru
      _
    // Predicated region
    $region14: #{tpu_custom_call.1} parent=1 // pred_check
      _
    $region15: #{tpu_custom_call.1} parent=1 // pred_check_branch
      %39 = sbr.rel (0) target = $region17
    $region16: #{tpu_custom_call.1} parent=1 // pred_region
      _
    $region17: #{tpu_custom_call.1} parent=1 // pred_fallthru
      _
    // Predicated region
    $region18: #{tpu_custom_call.1} parent=1 // pred_check
      _
    $region19: #{tpu_custom_call.1} parent=1 // pred_check_branch
      %41 = sbr.rel (0) target = $region21
    $region20: #{tpu_custom_call.1} parent=1 // pred_region
      %43 = dma.done [#allocation3], 256
    $region21: #{tpu_custom_call.1} parent=1 // pred_fallthru
      _
    // Predicated region
    $region22: #{tpu_custom_call.1} parent=1 // pred_check
      _
    $region23: #{tpu_custom_call.1} parent=1 // pred_check_branch
      %45 = sbr.rel (0) target = $region25
    $region24: #{tpu_custom_call.1} parent=1 // pred_region
      %47 = dma.done [#allocation6], 32768
    $region25: #{tpu_custom_call.1} parent=1 // pred_fallthru
      _
    %v48 = vld [vmem:[#allocation2] sm:$0xff]
    %v49 = vld [vmem:[#allocation2 + $0x8] sm:$0xff]
    %v50 = vld [vmem:[%s1] sm:$0x3]
    %v51 = vld [vmem:[#allocation5] sm:$0xff]
    %v52 = vld [vmem:[#allocation5 + $0x8] sm:$0xff]
    %v53 = vld [vmem:[#allocation5 + $0x10] sm:$0xff]
    %v54 = vld [vmem:[#allocation5 + $0x18] sm:$0xff]
    %v55 = vld [vmem:[#allocation5 + $0x20] sm:$0xff]
    %v56 = vld [vmem:[#allocation5 + $0x28] sm:$0xff]
    %v57 = vld [vmem:[#allocation5 + $0x30] sm:$0xff]
    %v58 = vld [vmem:[#allocation5 + $0x38] sm:$0xff]
    %v59 = vld [vmem:[#allocation5 + $0x40] sm:$0xff]
    %v60 = vld [vmem:[#allocation5 + $0x48] sm:$0xff]
    %v61 = vld [vmem:[#allocation5 + $0x50] sm:$0xff]
    %v62 = vld [vmem:[#allocation5 + $0x58] sm:$0xff]
    %v63 = vld [vmem:[#allocation5 + $0x60] sm:$0xff]
    %v64 = vld [vmem:[#allocation5 + $0x68] sm:$0xff]
    %v65 = vld [vmem:[#allocation5 + $0x70] sm:$0xff]
    %v66 = vld [vmem:[#allocation5 + $0x78] sm:$0xff]
    %v67 = vld [vmem:[#allocation5 + $0x80] sm:$0xff]
    %v68 = vld [vmem:[#allocation5 + $0x88] sm:$0xff]
    %v69 = vld [vmem:[#allocation5 + $0x90] sm:$0xff]
    %v70 = vld [vmem:[#allocation5 + $0x98] sm:$0xff]
    %v71 = vld [vmem:[#allocation5 + $0xa0] sm:$0xff]
    %v72 = vld [vmem:[#allocation5 + $0xa8] sm:$0xff]
    %v73 = vld [vmem:[#allocation5 + $0xb0] sm:$0xff]
    %v74 = vld [vmem:[#allocation5 + $0xb8] sm:$0xff]
    %v75 = vld [vmem:[#allocation5 + $0xc0] sm:$0xff]
    %v76 = vld [vmem:[#allocation5 + $0xc8] sm:$0xff]
    %v77 = vld [vmem:[#allocation5 + $0xd0] sm:$0xff]
    %v78 = vld [vmem:[#allocation5 + $0xd8] sm:$0xff]
    %v79 = vld [vmem:[#allocation5 + $0xe0] sm:$0xff]
    %v80 = vld [vmem:[#allocation5 + $0xe8] sm:$0xff]
    %v81 = vld [vmem:[#allocation5 + $0xf0] sm:$0xff]
    %v82 = vld [vmem:[#allocation5 + $0xf8] sm:$0xff]
    %v83 = vld [vmem:[#allocation5 + $0x100] sm:$0xff]
    %v84 = vld [vmem:[#allocation5 + $0x108] sm:$0xff]
    %v85 = vld [vmem:[#allocation5 + $0x110] sm:$0xff]
    %v86 = vld [vmem:[#allocation5 + $0x118] sm:$0xff]
    %v87 = vld [vmem:[#allocation5 + $0x120] sm:$0xff]
    %v88 = vld [vmem:[#allocation5 + $0x128] sm:$0xff]
    %v89 = vld [vmem:[#allocation5 + $0x130] sm:$0xff]
    %v90 = vld [vmem:[#allocation5 + $0x138] sm:$0xff]
    %v91 = vld [vmem:[#allocation5 + $0x140] sm:$0xff]
    %v92 = vld [vmem:[#allocation5 + $0x148] sm:$0xff]
    %v93 = vld [vmem:[#allocation5 + $0x150] sm:$0xff]
    %v94 = vld [vmem:[#allocation5 + $0x158] sm:$0xff]
    %v95 = vld [vmem:[#allocation5 + $0x160] sm:$0xff]
    %v96 = vld [vmem:[#allocation5 + $0x168] sm:$0xff]
    %v97 = vld [vmem:[#allocation5 + $0x170] sm:$0xff]
    %v98 = vld [vmem:[#allocation5 + $0x178] sm:$0xff]
    %v99 = vld [vmem:[#allocation5 + $0x180] sm:$0xff]
    %v100 = vld [vmem:[#allocation5 + $0x188] sm:$0xff]
    %v101 = vld [vmem:[#allocation5 + $0x190] sm:$0xff]
    %v102 = vld [vmem:[#allocation5 + $0x198] sm:$0xff]
    %v103 = vld [vmem:[#allocation5 + $0x1a0] sm:$0xff]
    %v104 = vld [vmem:[#allocation5 + $0x1a8] sm:$0xff]
    %v105 = vld [vmem:[#allocation5 + $0x1b0] sm:$0xff]
    %v106 = vld [vmem:[#allocation5 + $0x1b8] sm:$0xff]
    %v107 = vld [vmem:[#allocation5 + $0x1c0] sm:$0xff]
    %v108 = vld [vmem:[#allocation5 + $0x1c8] sm:$0xff]
    %v109 = vld [vmem:[#allocation5 + $0x1d0] sm:$0xff]
    %v110 = vld [vmem:[#allocation5 + $0x1d8] sm:$0xff]
    %v111 = vld [vmem:[#allocation5 + $0x1e0] sm:$0xff]
    %v112 = vld [vmem:[#allocation5 + $0x1e8] sm:$0xff]
    %v113 = vld [vmem:[#allocation5 + $0x1f0] sm:$0xff]
    %v114 = vld [vmem:[#allocation5 + $0x1f8] sm:$0xff]
    %v115 = vld [vmem:[#allocation5 + $0x200] sm:$0xff]
    %v116 = vld [vmem:[#allocation5 + $0x208] sm:$0xff]
    %v117 = vld [vmem:[#allocation5 + $0x210] sm:$0xff]
    %v118 = vld [vmem:[#allocation5 + $0x218] sm:$0xff]
    %v119 = vld [vmem:[#allocation5 + $0x220] sm:$0xff]
    %v120 = vld [vmem:[#allocation5 + $0x228] sm:$0xff]
    %v121 = vld [vmem:[#allocation5 + $0x230] sm:$0xff]
    %v122 = vld [vmem:[#allocation5 + $0x238] sm:$0xff]
    %v123 = vld [vmem:[#allocation5 + $0x240] sm:$0xff]
    %v124 = vld [vmem:[#allocation5 + $0x248] sm:$0xff]
    %v125 = vld [vmem:[#allocation5 + $0x250] sm:$0xff]
    %v126 = vld [vmem:[#allocation5 + $0x258] sm:$0xff]
    %v127 = vld [vmem:[#allocation5 + $0x260] sm:$0xff]
    %v128 = vld [vmem:[#allocation5 + $0x268] sm:$0xff]
    %v129 = vld [vmem:[#allocation5 + $0x270] sm:$0xff]
    %v130 = vld [vmem:[#allocation5 + $0x278] sm:$0xff]
    %v131 = vld [vmem:[#allocation5 + $0x280] sm:$0xff]
    %v132 = vld [vmem:[#allocation5 + $0x288] sm:$0xff]
    %v133 = vld [vmem:[#allocation5 + $0x290] sm:$0xff]
    %v134 = vld [vmem:[#allocation5 + $0x298] sm:$0xff]
    %v135 = vld [vmem:[#allocation5 + $0x2a0] sm:$0xff]
    %v136 = vld [vmem:[#allocation5 + $0x2a8] sm:$0xff]
    %v137 = vld [vmem:[#allocation5 + $0x2b0] sm:$0xff]
    %v138 = vld [vmem:[#allocation5 + $0x2b8] sm:$0xff]
    %v139 = vld [vmem:[#allocation5 + $0x2c0] sm:$0xff]
    %v140 = vld [vmem:[#allocation5 + $0x2c8] sm:$0xff]
    %v141 = vld [vmem:[#allocation5 + $0x2d0] sm:$0xff]
    %v142 = vld [vmem:[#allocation5 + $0x2d8] sm:$0xff]
    %v143 = vld [vmem:[#allocation5 + $0x2e0] sm:$0xff]
    %v144 = vld [vmem:[#allocation5 + $0x2e8] sm:$0xff]
    %v145 = vld [vmem:[#allocation5 + $0x2f0] sm:$0xff]
    %v146 = vld [vmem:[#allocation5 + $0x2f8] sm:$0xff]
    %v147 = vld [vmem:[#allocation5 + $0x300] sm:$0xff]
    %v148 = vld [vmem:[#allocation5 + $0x308] sm:$0xff]
    %v149 = vld [vmem:[#allocation5 + $0x310] sm:$0xff]
    %v150 = vld [vmem:[#allocation5 + $0x318] sm:$0xff]
    %v151 = vld [vmem:[#allocation5 + $0x320] sm:$0xff]
    %v152 = vld [vmem:[#allocation5 + $0x328] sm:$0xff]
    %v153 = vld [vmem:[#allocation5 + $0x330] sm:$0xff]
    %v154 = vld [vmem:[#allocation5 + $0x338] sm:$0xff]
    %v155 = vld [vmem:[#allocation5 + $0x340] sm:$0xff]
    %v156 = vld [vmem:[#allocation5 + $0x348] sm:$0xff]
    %v157 = vld [vmem:[#allocation5 + $0x350] sm:$0xff]
    %v158 = vld [vmem:[#allocation5 + $0x358] sm:$0xff]
    %v159 = vld [vmem:[#allocation5 + $0x360] sm:$0xff]
    %v160 = vld [vmem:[#allocation5 + $0x368] sm:$0xff]
    %v161 = vld [vmem:[#allocation5 + $0x370] sm:$0xff]
    %v162 = vld [vmem:[#allocation5 + $0x378] sm:$0xff]
    %v163 = vld [vmem:[#allocation5 + $0x380] sm:$0xff]
    %v164 = vld [vmem:[#allocation5 + $0x388] sm:$0xff]
    %v165 = vld [vmem:[#allocation5 + $0x390] sm:$0xff]
    %v166 = vld [vmem:[#allocation5 + $0x398] sm:$0xff]
    %v167 = vld [vmem:[#allocation5 + $0x3a0] sm:$0xff]
    %v168 = vld [vmem:[#allocation5 + $0x3a8] sm:$0xff]
    %v169 = vld [vmem:[#allocation5 + $0x3b0] sm:$0xff]
    %v170 = vld [vmem:[#allocation5 + $0x3b8] sm:$0xff]
    %v171 = vld [vmem:[#allocation5 + $0x3c0] sm:$0xff]
    %v172 = vld [vmem:[#allocation5 + $0x3c8] sm:$0xff]
    %v173 = vld [vmem:[#allocation5 + $0x3d0] sm:$0xff]
    %v174 = vld [vmem:[#allocation5 + $0x3d8] sm:$0xff]
    %v175 = vld [vmem:[#allocation5 + $0x3e0] sm:$0xff]
    %v176 = vld [vmem:[#allocation5 + $0x3e8] sm:$0xff]
    %v177 = vld [vmem:[#allocation5 + $0x3f0] sm:$0xff]
    %v178 = vld [vmem:[#allocation5 + $0x3f8] sm:$0xff]
    %v179 = vld [vmem:[#allocation5 + $0x400] sm:$0xff]
    %v180 = vld [vmem:[#allocation5 + $0x408] sm:$0xff]
    %v181 = vld [vmem:[#allocation5 + $0x410] sm:$0xff]
    %v182 = vld [vmem:[#allocation5 + $0x418] sm:$0xff]
    %v183 = vld [vmem:[#allocation5 + $0x420] sm:$0xff]
    %v184 = vld [vmem:[#allocation5 + $0x428] sm:$0xff]
    %v185 = vld [vmem:[#allocation5 + $0x430] sm:$0xff]
    %v186 = vld [vmem:[#allocation5 + $0x438] sm:$0xff]
    %v187 = vld [vmem:[#allocation5 + $0x440] sm:$0xff]
    %v188 = vld [vmem:[#allocation5 + $0x448] sm:$0xff]
    %v189 = vld [vmem:[#allocation5 + $0x450] sm:$0xff]
    %v190 = vld [vmem:[#allocation5 + $0x458] sm:$0xff]
    %v191 = vld [vmem:[#allocation5 + $0x460] sm:$0xff]
    %v192 = vld [vmem:[#allocation5 + $0x468] sm:$0xff]
    %v193 = vld [vmem:[#allocation5 + $0x470] sm:$0xff]
    %v194 = vld [vmem:[#allocation5 + $0x478] sm:$0xff]
    %v195 = vld [vmem:[#allocation5 + $0x480] sm:$0xff]
    %v196 = vld [vmem:[#allocation5 + $0x488] sm:$0xff]
    %v197 = vld [vmem:[#allocation5 + $0x490] sm:$0xff]
    %v198 = vld [vmem:[#allocation5 + $0x498] sm:$0xff]
    %v199 = vld [vmem:[#allocation5 + $0x4a0] sm:$0xff]
    %v200 = vld [vmem:[#allocation5 + $0x4a8] sm:$0xff]
    %v201 = vld [vmem:[#allocation5 + $0x4b0] sm:$0xff]
    %v202 = vld [vmem:[#allocation5 + $0x4b8] sm:$0xff]
    %v203 = vld [vmem:[#allocation5 + $0x4c0] sm:$0xff]
    %v204 = vld [vmem:[#allocation5 + $0x4c8] sm:$0xff]
    %v205 = vld [vmem:[#allocation5 + $0x4d0] sm:$0xff]
    %v206 = vld [vmem:[#allocation5 + $0x4d8] sm:$0xff]
    %v207 = vld [vmem:[#allocation5 + $0x4e0] sm:$0xff]
    %v208 = vld [vmem:[#allocation5 + $0x4e8] sm:$0xff]
    %v209 = vld [vmem:[#allocation5 + $0x4f0] sm:$0xff]
    %v210 = vld [vmem:[#allocation5 + $0x4f8] sm:$0xff]
    %v211 = vld [vmem:[#allocation5 + $0x500] sm:$0xff]
    %v212 = vld [vmem:[#allocation5 + $0x508] sm:$0xff]
    %v213 = vld [vmem:[#allocation5 + $0x510] sm:$0xff]
    %v214 = vld [vmem:[#allocation5 + $0x518] sm:$0xff]
    %v215 = vld [vmem:[#allocation5 + $0x520] sm:$0xff]
    %v216 = vld [vmem:[#allocation5 + $0x528] sm:$0xff]
    %v217 = vld [vmem:[#allocation5 + $0x530] sm:$0xff]
    %v218 = vld [vmem:[#allocation5 + $0x538] sm:$0xff]
    %v219 = vld [vmem:[#allocation5 + $0x540] sm:$0xff]
    %v220 = vld [vmem:[#allocation5 + $0x548] sm:$0xff]
    %v221 = vld [vmem:[#allocation5 + $0x550] sm:$0xff]
    %v222 = vld [vmem:[#allocation5 + $0x558] sm:$0xff]
    %v223 = vld [vmem:[#allocation5 + $0x560] sm:$0xff]
    %v224 = vld [vmem:[#allocation5 + $0x568] sm:$0xff]
    %v225 = vld [vmem:[#allocation5 + $0x570] sm:$0xff]
    %v226 = vld [vmem:[#allocation5 + $0x578] sm:$0xff]
    %v227 = vld [vmem:[#allocation5 + $0x580] sm:$0xff]
    %v228 = vld [vmem:[#allocation5 + $0x588] sm:$0xff]
    %v229 = vld [vmem:[#allocation5 + $0x590] sm:$0xff]
    %v230 = vld [vmem:[#allocation5 + $0x598] sm:$0xff]
    %v231 = vld [vmem:[#allocation5 + $0x5a0] sm:$0xff]
    %v232 = vld [vmem:[#allocation5 + $0x5a8] sm:$0xff]
    %v233 = vld [vmem:[#allocation5 + $0x5b0] sm:$0xff]
    %v234 = vld [vmem:[#allocation5 + $0x5b8] sm:$0xff]
    %v235 = vld [vmem:[#allocation5 + $0x5c0] sm:$0xff]
    %v236 = vld [vmem:[#allocation5 + $0x5c8] sm:$0xff]
    %v237 = vld [vmem:[#allocation5 + $0x5d0] sm:$0xff]
    %v238 = vld [vmem:[#allocation5 + $0x5d8] sm:$0xff]
    %v239 = vld [vmem:[#allocation5 + $0x5e0] sm:$0xff]
    %v240 = vld [vmem:[#allocation5 + $0x5e8] sm:$0xff]
    %v241 = vld [vmem:[#allocation5 + $0x5f0] sm:$0xff]
    %v242 = vld [vmem:[#allocation5 + $0x5f8] sm:$0xff]
    %v243 = vld [vmem:[#allocation5 + $0x600] sm:$0xff]
    %v244 = vld [vmem:[#allocation5 + $0x608] sm:$0xff]
    %v245 = vld [vmem:[#allocation5 + $0x610] sm:$0xff]
    %v246 = vld [vmem:[#allocation5 + $0x618] sm:$0xff]
    %v247 = vld [vmem:[#allocation5 + $0x620] sm:$0xff]
    %v248 = vld [vmem:[#allocation5 + $0x628] sm:$0xff]
    %v249 = vld [vmem:[#allocation5 + $0x630] sm:$0xff]
    %v250 = vld [vmem:[#allocation5 + $0x638] sm:$0xff]
    %v251 = vld [vmem:[#allocation5 + $0x640] sm:$0xff]
    %v252 = vld [vmem:[#allocation5 + $0x648] sm:$0xff]
    %v253 = vld [vmem:[#allocation5 + $0x650] sm:$0xff]
    %v254 = vld [vmem:[#allocation5 + $0x658] sm:$0xff]
    %v255 = vld [vmem:[#allocation5 + $0x660] sm:$0xff]
    %v256 = vld [vmem:[#allocation5 + $0x668] sm:$0xff]
    %v257 = vld [vmem:[#allocation5 + $0x670] sm:$0xff]
    %v258 = vld [vmem:[#allocation5 + $0x678] sm:$0xff]
    %v259 = vld [vmem:[#allocation5 + $0x680] sm:$0xff]
    %v260 = vld [vmem:[#allocation5 + $0x688] sm:$0xff]
    %v261 = vld [vmem:[#allocation5 + $0x690] sm:$0xff]
    %v262 = vld [vmem:[#allocation5 + $0x698] sm:$0xff]
    %v263 = vld [vmem:[#allocation5 + $0x6a0] sm:$0xff]
    %v264 = vld [vmem:[#allocation5 + $0x6a8] sm:$0xff]
    %v265 = vld [vmem:[#allocation5 + $0x6b0] sm:$0xff]
    %v266 = vld [vmem:[#allocation5 + $0x6b8] sm:$0xff]
    %v267 = vld [vmem:[#allocation5 + $0x6c0] sm:$0xff]
    %v268 = vld [vmem:[#allocation5 + $0x6c8] sm:$0xff]
    %v269 = vld [vmem:[#allocation5 + $0x6d0] sm:$0xff]
    %v270 = vld [vmem:[#allocation5 + $0x6d8] sm:$0xff]
    %v271 = vld [vmem:[#allocation5 + $0x6e0] sm:$0xff]
    %v272 = vld [vmem:[#allocation5 + $0x6e8] sm:$0xff]
    %v273 = vld [vmem:[#allocation5 + $0x6f0] sm:$0xff]
    %v274 = vld [vmem:[#allocation5 + $0x6f8] sm:$0xff]
    %v275 = vld [vmem:[#allocation5 + $0x700] sm:$0xff]
    %v276 = vld [vmem:[#allocation5 + $0x708] sm:$0xff]
    %v277 = vld [vmem:[#allocation5 + $0x710] sm:$0xff]
    %v278 = vld [vmem:[#allocation5 + $0x718] sm:$0xff]
    %v279 = vld [vmem:[#allocation5 + $0x720] sm:$0xff]
    %v280 = vld [vmem:[#allocation5 + $0x728] sm:$0xff]
    %v281 = vld [vmem:[#allocation5 + $0x730] sm:$0xff]
    %v282 = vld [vmem:[#allocation5 + $0x738] sm:$0xff]
    %v283 = vld [vmem:[#allocation5 + $0x740] sm:$0xff]
    %v284 = vld [vmem:[#allocation5 + $0x748] sm:$0xff]
    %v285 = vld [vmem:[#allocation5 + $0x750] sm:$0xff]
    %v286 = vld [vmem:[#allocation5 + $0x758] sm:$0xff]
    %v287 = vld [vmem:[#allocation5 + $0x760] sm:$0xff]
    %v288 = vld [vmem:[#allocation5 + $0x768] sm:$0xff]
    %v289 = vld [vmem:[#allocation5 + $0x770] sm:$0xff]
    %v290 = vld [vmem:[#allocation5 + $0x778] sm:$0xff]
    %v291 = vld [vmem:[#allocation5 + $0x780] sm:$0xff]
    %v292 = vld [vmem:[#allocation5 + $0x788] sm:$0xff]
    %v293 = vld [vmem:[#allocation5 + $0x790] sm:$0xff]
    %v294 = vld [vmem:[#allocation5 + $0x798] sm:$0xff]
    %v295 = vld [vmem:[#allocation5 + $0x7a0] sm:$0xff]
    %v296 = vld [vmem:[#allocation5 + $0x7a8] sm:$0xff]
    %v297 = vld [vmem:[#allocation5 + $0x7b0] sm:$0xff]
    %v298 = vld [vmem:[#allocation5 + $0x7b8] sm:$0xff]
    %v299 = vld [vmem:[#allocation5 + $0x7c0] sm:$0xff]
    %v300 = vld [vmem:[#allocation5 + $0x7c8] sm:$0xff]
    %v301 = vld [vmem:[#allocation5 + $0x7d0] sm:$0xff]
    %v302 = vld [vmem:[#allocation5 + $0x7d8] sm:$0xff]
    %v303 = vld [vmem:[#allocation5 + $0x7e0] sm:$0xff]
    %v304 = vld [vmem:[#allocation5 + $0x7e8] sm:$0xff]
    %v305 = vld [vmem:[#allocation5 + $0x7f0] sm:$0xff]
    %v306 = vld [vmem:[#allocation5 + $0x7f8] sm:$0xff]
    %v307 = vld [vmem:[%s3] sm:$0x3]
    %310 = vst [vmem:[#allocation1] ss:$2 sm:$0xff] %v48
    %s311 = scalar_lea.vmem [#allocation1], 16
    %312 = vst [vmem:[%s311] ss:$2 sm:$0xff] %v49
    %v313 = vld.sshfl [vmem:[#allocation1] sm:$0xff pattern:$0x75316420]
    %v314 = vld.sshfl [vmem:[#allocation1 + $0x8] sm:$0xff pattern:$0x75316420]
    %v315 = vld.sshfl [vmem:[#allocation1 + $0x10] sm:$0xff pattern:$0x75316420]
    %v316 = vld.sshfl [vmem:[#allocation1 + $0x18] sm:$0xff pattern:$0x75316420]
    %vm317 = vcmask 31744
    %v319 = vsel %vm317, %v50, 0
    %vm321 = vcmask 1043456
    %v322 = vsel %vm321, %v313, 0
    %v324 = vsel %vm321, %v314, 0
    %v326 = vsel %vm321, %v315, 0
    %v328 = vsel %vm321, %v316, 0
    %330 = vmatpush.msra.mxu0 0.0
    %331 = vmatpush.msra.mxu0 0.0
    %332 = vmatpush.msra.mxu0 0.0
    %333 = vmatpush.msra.mxu0 0.0
    %334 = vmatpush.msra.mxu0 0.0
    %335 = vmatpush.msra.mxu0 0.0
    %336 = vmatpush.msra.mxu0 0.0
    %337 = vmatpush.msra.mxu0 0.0
    %338 = vmatpush.msra.mxu0 0.0
    %339 = vmatpush.msra.mxu0 0.0
    %340 = vmatpush.msra.mxu0 0.0
    %341 = vmatpush.msra.mxu0 0.0
    %342 = vmatpush.msra.mxu0 0.0
    %343 = vmatpush.msra.mxu0 0.0
    %344 = vmatpush.msra.mxu0 0.0
    %345 = vmatpush.msra.mxu0 %v322
    %346 = vmatmul.f32.gmra.mxu0 %v319
    %v347 = vpop.f32.mrf.mxu0
    %v348 = vadd.f32 0.0, %v347
    %349 = vdwg.mxu0
    %350 = vmatpush.msra.mxu0 0.0
    %351 = vmatpush.msra.mxu0 0.0
    %352 = vmatpush.msra.mxu0 0.0
    %353 = vmatpush.msra.mxu0 0.0
    %354 = vmatpush.msra.mxu0 0.0
    %355 = vmatpush.msra.mxu0 0.0
    %356 = vmatpush.msra.mxu0 0.0
    %357 = vmatpush.msra.mxu0 0.0
    %358 = vmatpush.msra.mxu0 0.0
    %359 = vmatpush.msra.mxu0 0.0
    %360 = vmatpush.msra.mxu0 0.0
    %361 = vmatpush.msra.mxu0 0.0
    %362 = vmatpush.msra.mxu0 0.0
    %363 = vmatpush.msra.mxu0 0.0
    %364 = vmatpush.msra.mxu0 0.0
    %365 = vmatpush.msra.mxu0 %v324
    %366 = vmatmul.f32.gmra.mxu0 %v319
    %v367 = vpop.f32.mrf.mxu0
    %v368 = vadd.f32 0.0, %v367
    %369 = vdwg.mxu0
    %370 = vmatpush.msra.mxu0 0.0
    %371 = vmatpush.msra.mxu0 0.0
    %372 = vmatpush.msra.mxu0 0.0
    %373 = vmatpush.msra.mxu0 0.0
    %374 = vmatpush.msra.mxu0 0.0
    %375 = vmatpush.msra.mxu0 0.0
    %376 = vmatpush.msra.mxu0 0.0
    %377 = vmatpush.msra.mxu0 0.0
    %378 = vmatpush.msra.mxu0 0.0
    %379 = vmatpush.msra.mxu0 0.0
    %380 = vmatpush.msra.mxu0 0.0
    %381 = vmatpush.msra.mxu0 0.0
    %382 = vmatpush.msra.mxu0 0.0
    %383 = vmatpush.msra.mxu0 0.0
    %384 = vmatpush.msra.mxu0 0.0
    %385 = vmatpush.msra.mxu0 %v326
    %386 = vmatmul.f32.gmra.mxu0 %v319
    %v387 = vpop.f32.mrf.mxu0
    %v388 = vadd.f32 0.0, %v387
    %389 = vdwg.mxu0
    %390 = vmatpush.msra.mxu0 0.0
    %391 = vmatpush.msra.mxu0 0.0
    %392 = vmatpush.msra.mxu0 0.0
    %393 = vmatpush.msra.mxu0 0.0
    %394 = vmatpush.msra.mxu0 0.0
    %395 = vmatpush.msra.mxu0 0.0
    %396 = vmatpush.msra.mxu0 0.0
    %397 = vmatpush.msra.mxu0 0.0
    %398 = vmatpush.msra.mxu0 0.0
    %399 = vmatpush.msra.mxu0 0.0
    %400 = vmatpush.msra.mxu0 0.0
    %401 = vmatpush.msra.mxu0 0.0
    %402 = vmatpush.msra.mxu0 0.0
    %403 = vmatpush.msra.mxu0 0.0
    %404 = vmatpush.msra.mxu0 0.0
    %405 = vmatpush.msra.mxu0 %v328
    %406 = vmatmul.f32.gmra.mxu0 %v319
    %v407 = vpop.f32.mrf.mxu0
    %v408 = vadd.f32 0.0, %v407
    %409 = vdwg.mxu0
    %411 = vset.pattern.permute.xlu0 0
    %412 = vperm.xlu0 %411, %v307
    %v413 = vpop.permute.xlu0 %412
    %415 = vmatpush.msra.mxu0 %v171
    %416 = vmatpush.msra.mxu0 %v163
    %417 = vmatpush.msra.mxu0 %v155
    %418 = vmatpush.msra.mxu0 %v147
    %419 = vmatpush.msra.mxu0 %v139
    %420 = vmatpush.msra.mxu0 %v131
    %421 = vmatpush.msra.mxu0 %v123
    %422 = vmatpush.msra.mxu0 %v115
    %423 = vmatpush.msra.mxu0 %v107
    %424 = vmatpush.msra.mxu0 %v99
    %425 = vmatpush.msra.mxu0 %v91
    %426 = vmatpush.msra.mxu0 %v83
    %427 = vmatpush.msra.mxu0 %v75
    %428 = vmatpush.msra.mxu0 %v67
    %429 = vmatpush.msra.mxu0 %v59
    %430 = vmatpush.msra.mxu0 %v51
    %431 = vmatmul.f32.gmra.mxu0 %v348
    %v432 = vpop.f32.mrf.mxu0
    %v433 = vadd.f32 %v413, %v432
    %434 = vdwg.mxu0
    %435 = vmatpush.msra.mxu0 %v299
    %436 = vmatpush.msra.mxu0 %v291
    %437 = vmatpush.msra.mxu0 %v283
    %438 = vmatpush.msra.mxu0 %v275
    %439 = vmatpush.msra.mxu0 %v267
    %440 = vmatpush.msra.mxu0 %v259
    %441 = vmatpush.msra.mxu0 %v251
    %442 = vmatpush.msra.mxu0 %v243
    %443 = vmatpush.msra.mxu0 %v235
    %444 = vmatpush.msra.mxu0 %v227
    %445 = vmatpush.msra.mxu0 %v219
    %446 = vmatpush.msra.mxu0 %v211
    %447 = vmatpush.msra.mxu0 %v203
    %448 = vmatpush.msra.mxu0 %v195
    %449 = vmatpush.msra.mxu0 %v187
    %450 = vmatpush.msra.mxu0 %v179
    %451 = vmatmul.f32.gmra.mxu0 %v368
    %v452 = vpop.f32.mrf.mxu0
    %v453 = vadd.f32 %v433, %v452
    %454 = vdwg.mxu0
    %455 = vmatpush.msra.mxu0 %v172
    %456 = vmatpush.msra.mxu0 %v164
    %457 = vmatpush.msra.mxu0 %v156
    %458 = vmatpush.msra.mxu0 %v148
    %459 = vmatpush.msra.mxu0 %v140
    %460 = vmatpush.msra.mxu0 %v132
    %461 = vmatpush.msra.mxu0 %v124
    %462 = vmatpush.msra.mxu0 %v116
    %463 = vmatpush.msra.mxu0 %v108
    %464 = vmatpush.msra.mxu0 %v100
    %465 = vmatpush.msra.mxu0 %v92
    %466 = vmatpush.msra.mxu0 %v84
    %467 = vmatpush.msra.mxu0 %v76
    %468 = vmatpush.msra.mxu0 %v68
    %469 = vmatpush.msra.mxu0 %v60
    %470 = vmatpush.msra.mxu0 %v52
    %471 = vmatmul.f32.gmra.mxu0 %v348
    %v472 = vpop.f32.mrf.mxu0
    %v473 = vadd.f32 %v413, %v472
    %474 = vdwg.mxu0
    %475 = vmatpush.msra.mxu0 %v300
    %476 = vmatpush.msra.mxu0 %v292
    %477 = vmatpush.msra.mxu0 %v284
    %478 = vmatpush.msra.mxu0 %v276
    %479 = vmatpush.msra.mxu0 %v268
    %480 = vmatpush.msra.mxu0 %v260
    %481 = vmatpush.msra.mxu0 %v252
    %482 = vmatpush.msra.mxu0 %v244
    %483 = vmatpush.msra.mxu0 %v236
    %484 = vmatpush.msra.mxu0 %v228
    %485 = vmatpush.msra.mxu0 %v220
    %486 = vmatpush.msra.mxu0 %v212
    %487 = vmatpush.msra.mxu0 %v204
    %488 = vmatpush.msra.mxu0 %v196
    %489 = vmatpush.msra.mxu0 %v188
    %490 = vmatpush.msra.mxu0 %v180
    %491 = vmatmul.f32.gmra.mxu0 %v368
    %v492 = vpop.f32.mrf.mxu0
    %v493 = vadd.f32 %v473, %v492
    %494 = vdwg.mxu0
    %495 = vmatpush.msra.mxu0 %v173
    %496 = vmatpush.msra.mxu0 %v165
    %497 = vmatpush.msra.mxu0 %v157
    %498 = vmatpush.msra.mxu0 %v149
    %499 = vmatpush.msra.mxu0 %v141
    %500 = vmatpush.msra.mxu0 %v133
    %501 = vmatpush.msra.mxu0 %v125
    %502 = vmatpush.msra.mxu0 %v117
    %503 = vmatpush.msra.mxu0 %v109
    %504 = vmatpush.msra.mxu0 %v101
    %505 = vmatpush.msra.mxu0 %v93
    %506 = vmatpush.msra.mxu0 %v85
    %507 = vmatpush.msra.mxu0 %v77
    %508 = vmatpush.msra.mxu0 %v69
    %509 = vmatpush.msra.mxu0 %v61
    %510 = vmatpush.msra.mxu0 %v53
    %511 = vmatmul.f32.gmra.mxu0 %v348
    %v512 = vpop.f32.mrf.mxu0
    %v513 = vadd.f32 %v413, %v512
    %514 = vdwg.mxu0
    %515 = vmatpush.msra.mxu0 %v301
    %516 = vmatpush.msra.mxu0 %v293
    %517 = vmatpush.msra.mxu0 %v285
    %518 = vmatpush.msra.mxu0 %v277
    %519 = vmatpush.msra.mxu0 %v269
    %520 = vmatpush.msra.mxu0 %v261
    %521 = vmatpush.msra.mxu0 %v253
    %522 = vmatpush.msra.mxu0 %v245
    %523 = vmatpush.msra.mxu0 %v237
    %524 = vmatpush.msra.mxu0 %v229
    %525 = vmatpush.msra.mxu0 %v221
    %526 = vmatpush.msra.mxu0 %v213
    %527 = vmatpush.msra.mxu0 %v205
    %528 = vmatpush.msra.mxu0 %v197
    %529 = vmatpush.msra.mxu0 %v189
    %530 = vmatpush.msra.mxu0 %v181
    %531 = vmatmul.f32.gmra.mxu0 %v368
    %v532 = vpop.f32.mrf.mxu0
    %v533 = vadd.f32 %v513, %v532
    %534 = vdwg.mxu0
    %535 = vmatpush.msra.mxu0 %v174
    %536 = vmatpush.msra.mxu0 %v166
    %537 = vmatpush.msra.mxu0 %v158
    %538 = vmatpush.msra.mxu0 %v150
    %539 = vmatpush.msra.mxu0 %v142
    %540 = vmatpush.msra.mxu0 %v134
    %541 = vmatpush.msra.mxu0 %v126
    %542 = vmatpush.msra.mxu0 %v118
    %543 = vmatpush.msra.mxu0 %v110
    %544 = vmatpush.msra.mxu0 %v102
    %545 = vmatpush.msra.mxu0 %v94
    %546 = vmatpush.msra.mxu0 %v86
    %547 = vmatpush.msra.mxu0 %v78
    %548 = vmatpush.msra.mxu0 %v70
    %549 = vmatpush.msra.mxu0 %v62
    %550 = vmatpush.msra.mxu0 %v54
    %551 = vmatmul.f32.gmra.mxu0 %v348
    %v552 = vpop.f32.mrf.mxu0
    %v553 = vadd.f32 %v413, %v552
    %554 = vdwg.mxu0
    %555 = vmatpush.msra.mxu0 %v302
    %556 = vmatpush.msra.mxu0 %v294
    %557 = vmatpush.msra.mxu0 %v286
    %558 = vmatpush.msra.mxu0 %v278
    %559 = vmatpush.msra.mxu0 %v270
    %560 = vmatpush.msra.mxu0 %v262
    %561 = vmatpush.msra.mxu0 %v254
    %562 = vmatpush.msra.mxu0 %v246
    %563 = vmatpush.msra.mxu0 %v238
    %564 = vmatpush.msra.mxu0 %v230
    %565 = vmatpush.msra.mxu0 %v222
    %566 = vmatpush.msra.mxu0 %v214
    %567 = vmatpush.msra.mxu0 %v206
    %568 = vmatpush.msra.mxu0 %v198
    %569 = vmatpush.msra.mxu0 %v190
    %570 = vmatpush.msra.mxu0 %v182
    %571 = vmatmul.f32.gmra.mxu0 %v368
    %v572 = vpop.f32.mrf.mxu0
    %v573 = vadd.f32 %v553, %v572
    %574 = vdwg.mxu0
    %575 = vmatpush.msra.mxu0 %v175
    %576 = vmatpush.msra.mxu0 %v167
    %577 = vmatpush.msra.mxu0 %v159
    %578 = vmatpush.msra.mxu0 %v151
    %579 = vmatpush.msra.mxu0 %v143
    %580 = vmatpush.msra.mxu0 %v135
    %581 = vmatpush.msra.mxu0 %v127
    %582 = vmatpush.msra.mxu0 %v119
    %583 = vmatpush.msra.mxu0 %v111
    %584 = vmatpush.msra.mxu0 %v103
    %585 = vmatpush.msra.mxu0 %v95
    %586 = vmatpush.msra.mxu0 %v87
    %587 = vmatpush.msra.mxu0 %v79
    %588 = vmatpush.msra.mxu0 %v71
    %589 = vmatpush.msra.mxu0 %v63
    %590 = vmatpush.msra.mxu0 %v55
    %591 = vmatmul.f32.gmra.mxu0 %v348
    %v592 = vpop.f32.mrf.mxu0
    %v593 = vadd.f32 %v413, %v592
    %594 = vdwg.mxu0
    %595 = vmatpush.msra.mxu0 %v303
    %596 = vmatpush.msra.mxu0 %v295
    %597 = vmatpush.msra.mxu0 %v287
    %598 = vmatpush.msra.mxu0 %v279
    %599 = vmatpush.msra.mxu0 %v271
    %600 = vmatpush.msra.mxu0 %v263
    %601 = vmatpush.msra.mxu0 %v255
    %602 = vmatpush.msra.mxu0 %v247
    %603 = vmatpush.msra.mxu0 %v239
    %604 = vmatpush.msra.mxu0 %v231
    %605 = vmatpush.msra.mxu0 %v223
    %606 = vmatpush.msra.mxu0 %v215
    %607 = vmatpush.msra.mxu0 %v207
    %608 = vmatpush.msra.mxu0 %v199
    %609 = vmatpush.msra.mxu0 %v191
    %610 = vmatpush.msra.mxu0 %v183
    %611 = vmatmul.f32.gmra.mxu0 %v368
    %v612 = vpop.f32.mrf.mxu0
    %v613 = vadd.f32 %v593, %v612
    %614 = vdwg.mxu0
    %615 = vmatpush.msra.mxu0 %v176
    %616 = vmatpush.msra.mxu0 %v168
    %617 = vmatpush.msra.mxu0 %v160
    %618 = vmatpush.msra.mxu0 %v152
    %619 = vmatpush.msra.mxu0 %v144
    %620 = vmatpush.msra.mxu0 %v136
    %621 = vmatpush.msra.mxu0 %v128
    %622 = vmatpush.msra.mxu0 %v120
    %623 = vmatpush.msra.mxu0 %v112
    %624 = vmatpush.msra.mxu0 %v104
    %625 = vmatpush.msra.mxu0 %v96
    %626 = vmatpush.msra.mxu0 %v88
    %627 = vmatpush.msra.mxu0 %v80
    %628 = vmatpush.msra.mxu0 %v72
    %629 = vmatpush.msra.mxu0 %v64
    %630 = vmatpush.msra.mxu0 %v56
    %631 = vmatmul.f32.gmra.mxu0 %v348
    %v632 = vpop.f32.mrf.mxu0
    %v633 = vadd.f32 %v413, %v632
    %634 = vdwg.mxu0
    %635 = vmatpush.msra.mxu0 %v304
    %636 = vmatpush.msra.mxu0 %v296
    %637 = vmatpush.msra.mxu0 %v288
    %638 = vmatpush.msra.mxu0 %v280
    %639 = vmatpush.msra.mxu0 %v272
    %640 = vmatpush.msra.mxu0 %v264
    %641 = vmatpush.msra.mxu0 %v256
    %642 = vmatpush.msra.mxu0 %v248
    %643 = vmatpush.msra.mxu0 %v240
    %644 = vmatpush.msra.mxu0 %v232
    %645 = vmatpush.msra.mxu0 %v224
    %646 = vmatpush.msra.mxu0 %v216
    %647 = vmatpush.msra.mxu0 %v208
    %648 = vmatpush.msra.mxu0 %v200
    %649 = vmatpush.msra.mxu0 %v192
    %650 = vmatpush.msra.mxu0 %v184
    %651 = vmatmul.f32.gmra.mxu0 %v368
    %v652 = vpop.f32.mrf.mxu0
    %v653 = vadd.f32 %v633, %v652
    %654 = vdwg.mxu0
    %655 = vmatpush.msra.mxu0 %v177
    %656 = vmatpush.msra.mxu0 %v169
    %657 = vmatpush.msra.mxu0 %v161
    %658 = vmatpush.msra.mxu0 %v153
    %659 = vmatpush.msra.mxu0 %v145
    %660 = vmatpush.msra.mxu0 %v137
    %661 = vmatpush.msra.mxu0 %v129
    %662 = vmatpush.msra.mxu0 %v121
    %663 = vmatpush.msra.mxu0 %v113
    %664 = vmatpush.msra.mxu0 %v105
    %665 = vmatpush.msra.mxu0 %v97
    %666 = vmatpush.msra.mxu0 %v89
    %667 = vmatpush.msra.mxu0 %v81
    %668 = vmatpush.msra.mxu0 %v73
    %669 = vmatpush.msra.mxu0 %v65
    %670 = vmatpush.msra.mxu0 %v57
    %671 = vmatmul.f32.gmra.mxu0 %v348
    %v672 = vpop.f32.mrf.mxu0
    %v673 = vadd.f32 %v413, %v672
    %674 = vdwg.mxu0
    %675 = vmatpush.msra.mxu0 %v305
    %676 = vmatpush.msra.mxu0 %v297
    %677 = vmatpush.msra.mxu0 %v289
    %678 = vmatpush.msra.mxu0 %v281
    %679 = vmatpush.msra.mxu0 %v273
    %680 = vmatpush.msra.mxu0 %v265
    %681 = vmatpush.msra.mxu0 %v257
    %682 = vmatpush.msra.mxu0 %v249
    %683 = vmatpush.msra.mxu0 %v241
    %684 = vmatpush.msra.mxu0 %v233
    %685 = vmatpush.msra.mxu0 %v225
    %686 = vmatpush.msra.mxu0 %v217
    %687 = vmatpush.msra.mxu0 %v209
    %688 = vmatpush.msra.mxu0 %v201
    %689 = vmatpush.msra.mxu0 %v193
    %690 = vmatpush.msra.mxu0 %v185
    %691 = vmatmul.f32.gmra.mxu0 %v368
    %v692 = vpop.f32.mrf.mxu0
    %v693 = vadd.f32 %v673, %v692
    %694 = vdwg.mxu0
    %695 = vmatpush.msra.mxu0 %v178
    %696 = vmatpush.msra.mxu0 %v170
    %697 = vmatpush.msra.mxu0 %v162
    %698 = vmatpush.msra.mxu0 %v154
    %699 = vmatpush.msra.mxu0 %v146
    %700 = vmatpush.msra.mxu0 %v138
    %701 = vmatpush.msra.mxu0 %v130
    %702 = vmatpush.msra.mxu0 %v122
    %703 = vmatpush.msra.mxu0 %v114
    %704 = vmatpush.msra.mxu0 %v106
    %705 = vmatpush.msra.mxu0 %v98
    %706 = vmatpush.msra.mxu0 %v90
    %707 = vmatpush.msra.mxu0 %v82
    %708 = vmatpush.msra.mxu0 %v74
    %709 = vmatpush.msra.mxu0 %v66
    %710 = vmatpush.msra.mxu0 %v58
    %711 = vmatmul.f32.gmra.mxu0 %v348
    %v712 = vpop.f32.mrf.mxu0
    %v713 = vadd.f32 %v413, %v712
    %714 = vdwg.mxu0
    %715 = vmatpush.msra.mxu0 %v306
    %716 = vmatpush.msra.mxu0 %v298
    %717 = vmatpush.msra.mxu0 %v290
    %718 = vmatpush.msra.mxu0 %v282
    %719 = vmatpush.msra.mxu0 %v274
    %720 = vmatpush.msra.mxu0 %v266
    %721 = vmatpush.msra.mxu0 %v258
    %722 = vmatpush.msra.mxu0 %v250
    %723 = vmatpush.msra.mxu0 %v242
    %724 = vmatpush.msra.mxu0 %v234
    %725 = vmatpush.msra.mxu0 %v226
    %726 = vmatpush.msra.mxu0 %v218
    %727 = vmatpush.msra.mxu0 %v210
    %728 = vmatpush.msra.mxu0 %v202
    %729 = vmatpush.msra.mxu0 %v194
    %730 = vmatpush.msra.mxu0 %v186
    %731 = vmatmul.f32.gmra.mxu0 %v368
    %v732 = vpop.f32.mrf.mxu0
    %v733 = vadd.f32 %v713, %v732
    %734 = vdwg.mxu0
    %v743 = vrot.slane %v493, 6
    %v744 = vrot.slane %v533, 4
    %v745 = vrot.slane %v573, 2
    %v746 = vrot.slane %v653, 6
    %v747 = vrot.slane %v693, 4
    %v748 = vrot.slane %v733, 2
    %vm749 = vcmask 1041408
    %v750 = vsel %vm749, %v453, %v743
    %vm751 = vcmask 1045508
    %v752 = vsel %vm751, %v744, %v745
    %v753 = vsel %vm321, %v750, %v752
    %v754 = vsel %vm749, %v613, %v746
    %v755 = vsel %vm751, %v747, %v748
    %v756 = vsel %vm321, %v754, %v755
    %759 = vst [vmem:[#allocation7] sm:$0xff] %v753
    %760 = vst [vmem:[#allocation7 + $0x8] sm:$0xff] %v756
    %761 = vmatpush.msra.mxu0 %v171
    %762 = vmatpush.msra.mxu0 %v163
    %763 = vmatpush.msra.mxu0 %v155
    %764 = vmatpush.msra.mxu0 %v147
    %765 = vmatpush.msra.mxu0 %v139
    %766 = vmatpush.msra.mxu0 %v131
    %767 = vmatpush.msra.mxu0 %v123
    %768 = vmatpush.msra.mxu0 %v115
    %769 = vmatpush.msra.mxu0 %v107
    %770 = vmatpush.msra.mxu0 %v99
    %771 = vmatpush.msra.mxu0 %v91
    %772 = vmatpush.msra.mxu0 %v83
    %773 = vmatpush.msra.mxu0 %v75
    %774 = vmatpush.msra.mxu0 %v67
    %775 = vmatpush.msra.mxu0 %v59
    %776 = vmatpush.msra.mxu0 %v51
    %777 = vmatmul.f32.gmra.mxu0 %v388
    %v778 = vpop.f32.mrf.mxu0
    %v779 = vadd.f32 %v413, %v778
    %780 = vdwg.mxu0
    %781 = vmatpush.msra.mxu0 %v299
    %782 = vmatpush.msra.mxu0 %v291
    %783 = vmatpush.msra.mxu0 %v283
    %784 = vmatpush.msra.mxu0 %v275
    %785 = vmatpush.msra.mxu0 %v267
    %786 = vmatpush.msra.mxu0 %v259
    %787 = vmatpush.msra.mxu0 %v251
    %788 = vmatpush.msra.mxu0 %v243
    %789 = vmatpush.msra.mxu0 %v235
    %790 = vmatpush.msra.mxu0 %v227
    %791 = vmatpush.msra.mxu0 %v219
    %792 = vmatpush.msra.mxu0 %v211
    %793 = vmatpush.msra.mxu0 %v203
    %794 = vmatpush.msra.mxu0 %v195
    %795 = vmatpush.msra.mxu0 %v187
    %796 = vmatpush.msra.mxu0 %v179
    %797 = vmatmul.f32.gmra.mxu0 %v408
    %v798 = vpop.f32.mrf.mxu0
    %v799 = vadd.f32 %v779, %v798
    %800 = vdwg.mxu0
    %801 = vmatpush.msra.mxu0 %v172
    %802 = vmatpush.msra.mxu0 %v164
    %803 = vmatpush.msra.mxu0 %v156
    %804 = vmatpush.msra.mxu0 %v148
    %805 = vmatpush.msra.mxu0 %v140
    %806 = vmatpush.msra.mxu0 %v132
    %807 = vmatpush.msra.mxu0 %v124
    %808 = vmatpush.msra.mxu0 %v116
    %809 = vmatpush.msra.mxu0 %v108
    %810 = vmatpush.msra.mxu0 %v100
    %811 = vmatpush.msra.mxu0 %v92
    %812 = vmatpush.msra.mxu0 %v84
    %813 = vmatpush.msra.mxu0 %v76
    %814 = vmatpush.msra.mxu0 %v68
    %815 = vmatpush.msra.mxu0 %v60
    %816 = vmatpush.msra.mxu0 %v52
    %817 = vmatmul.f32.gmra.mxu0 %v388
    %v818 = vpop.f32.mrf.mxu0
    %v819 = vadd.f32 %v413, %v818
    %820 = vdwg.mxu0
    %821 = vmatpush.msra.mxu0 %v300
    %822 = vmatpush.msra.mxu0 %v292
    %823 = vmatpush.msra.mxu0 %v284
    %824 = vmatpush.msra.mxu0 %v276
    %825 = vmatpush.msra.mxu0 %v268
    %826 = vmatpush.msra.mxu0 %v260
    %827 = vmatpush.msra.mxu0 %v252
    %828 = vmatpush.msra.mxu0 %v244
    %829 = vmatpush.msra.mxu0 %v236
    %830 = vmatpush.msra.mxu0 %v228
    %831 = vmatpush.msra.mxu0 %v220
    %832 = vmatpush.msra.mxu0 %v212
    %833 = vmatpush.msra.mxu0 %v204
    %834 = vmatpush.msra.mxu0 %v196
    %835 = vmatpush.msra.mxu0 %v188
    %836 = vmatpush.msra.mxu0 %v180
    %837 = vmatmul.f32.gmra.mxu0 %v408
    %v838 = vpop.f32.mrf.mxu0
    %v839 = vadd.f32 %v819, %v838
    %840 = vdwg.mxu0
    %841 = vmatpush.msra.mxu0 %v173
    %842 = vmatpush.msra.mxu0 %v165
    %843 = vmatpush.msra.mxu0 %v157
    %844 = vmatpush.msra.mxu0 %v149
    %845 = vmatpush.msra.mxu0 %v141
    %846 = vmatpush.msra.mxu0 %v133
    %847 = vmatpush.msra.mxu0 %v125
    %848 = vmatpush.msra.mxu0 %v117
    %849 = vmatpush.msra.mxu0 %v109
    %850 = vmatpush.msra.mxu0 %v101
    %851 = vmatpush.msra.mxu0 %v93
    %852 = vmatpush.msra.mxu0 %v85
    %853 = vmatpush.msra.mxu0 %v77
    %854 = vmatpush.msra.mxu0 %v69
    %855 = vmatpush.msra.mxu0 %v61
    %856 = vmatpush.msra.mxu0 %v53
    %857 = vmatmul.f32.gmra.mxu0 %v388
    %v858 = vpop.f32.mrf.mxu0
    %v859 = vadd.f32 %v413, %v858
    %860 = vdwg.mxu0
    %861 = vmatpush.msra.mxu0 %v301
    %862 = vmatpush.msra.mxu0 %v293
    %863 = vmatpush.msra.mxu0 %v285
    %864 = vmatpush.msra.mxu0 %v277
    %865 = vmatpush.msra.mxu0 %v269
    %866 = vmatpush.msra.mxu0 %v261
    %867 = vmatpush.msra.mxu0 %v253
    %868 = vmatpush.msra.mxu0 %v245
    %869 = vmatpush.msra.mxu0 %v237
    %870 = vmatpush.msra.mxu0 %v229
    %871 = vmatpush.msra.mxu0 %v221
    %872 = vmatpush.msra.mxu0 %v213
    %873 = vmatpush.msra.mxu0 %v205
    %874 = vmatpush.msra.mxu0 %v197
    %875 = vmatpush.msra.mxu0 %v189
    %876 = vmatpush.msra.mxu0 %v181
    %877 = vmatmul.f32.gmra.mxu0 %v408
    %v878 = vpop.f32.mrf.mxu0
    %v879 = vadd.f32 %v859, %v878
    %880 = vdwg.mxu0
    %881 = vmatpush.msra.mxu0 %v174
    %882 = vmatpush.msra.mxu0 %v166
    %883 = vmatpush.msra.mxu0 %v158
    %884 = vmatpush.msra.mxu0 %v150
    %885 = vmatpush.msra.mxu0 %v142
    %886 = vmatpush.msra.mxu0 %v134
    %887 = vmatpush.msra.mxu0 %v126
    %888 = vmatpush.msra.mxu0 %v118
    %889 = vmatpush.msra.mxu0 %v110
    %890 = vmatpush.msra.mxu0 %v102
    %891 = vmatpush.msra.mxu0 %v94
    %892 = vmatpush.msra.mxu0 %v86
    %893 = vmatpush.msra.mxu0 %v78
    %894 = vmatpush.msra.mxu0 %v70
    %895 = vmatpush.msra.mxu0 %v62
    %896 = vmatpush.msra.mxu0 %v54
    %897 = vmatmul.f32.gmra.mxu0 %v388
    %v898 = vpop.f32.mrf.mxu0
    %v899 = vadd.f32 %v413, %v898
    %900 = vdwg.mxu0
    %901 = vmatpush.msra.mxu0 %v302
    %902 = vmatpush.msra.mxu0 %v294
    %903 = vmatpush.msra.mxu0 %v286
    %904 = vmatpush.msra.mxu0 %v278
    %905 = vmatpush.msra.mxu0 %v270
    %906 = vmatpush.msra.mxu0 %v262
    %907 = vmatpush.msra.mxu0 %v254
    %908 = vmatpush.msra.mxu0 %v246
    %909 = vmatpush.msra.mxu0 %v238
    %910 = vmatpush.msra.mxu0 %v230
    %911 = vmatpush.msra.mxu0 %v222
    %912 = vmatpush.msra.mxu0 %v214
    %913 = vmatpush.msra.mxu0 %v206
    %914 = vmatpush.msra.mxu0 %v198
    %915 = vmatpush.msra.mxu0 %v190
    %916 = vmatpush.msra.mxu0 %v182
    %917 = vmatmul.f32.gmra.mxu0 %v408
    %v918 = vpop.f32.mrf.mxu0
    %v919 = vadd.f32 %v899, %v918
    %920 = vdwg.mxu0
    %921 = vmatpush.msra.mxu0 %v175
    %922 = vmatpush.msra.mxu0 %v167
    %923 = vmatpush.msra.mxu0 %v159
    %924 = vmatpush.msra.mxu0 %v151
    %925 = vmatpush.msra.mxu0 %v143
    %926 = vmatpush.msra.mxu0 %v135
    %927 = vmatpush.msra.mxu0 %v127
    %928 = vmatpush.msra.mxu0 %v119
    %929 = vmatpush.msra.mxu0 %v111
    %930 = vmatpush.msra.mxu0 %v103
    %931 = vmatpush.msra.mxu0 %v95
    %932 = vmatpush.msra.mxu0 %v87
    %933 = vmatpush.msra.mxu0 %v79
    %934 = vmatpush.msra.mxu0 %v71
    %935 = vmatpush.msra.mxu0 %v63
    %936 = vmatpush.msra.mxu0 %v55
    %937 = vmatmul.f32.gmra.mxu0 %v388
    %v938 = vpop.f32.mrf.mxu0
    %v939 = vadd.f32 %v413, %v938
    %940 = vdwg.mxu0
    %941 = vmatpush.msra.mxu0 %v303
    %942 = vmatpush.msra.mxu0 %v295
    %943 = vmatpush.msra.mxu0 %v287
    %944 = vmatpush.msra.mxu0 %v279
    %945 = vmatpush.msra.mxu0 %v271
    %946 = vmatpush.msra.mxu0 %v263
    %947 = vmatpush.msra.mxu0 %v255
    %948 = vmatpush.msra.mxu0 %v247
    %949 = vmatpush.msra.mxu0 %v239
    %950 = vmatpush.msra.mxu0 %v231
    %951 = vmatpush.msra.mxu0 %v223
    %952 = vmatpush.msra.mxu0 %v215
    %953 = vmatpush.msra.mxu0 %v207
    %954 = vmatpush.msra.mxu0 %v199
    %955 = vmatpush.msra.mxu0 %v191
    %956 = vmatpush.msra.mxu0 %v183
    %957 = vmatmul.f32.gmra.mxu0 %v408
    %v958 = vpop.f32.mrf.mxu0
    %v959 = vadd.f32 %v939, %v958
    %960 = vdwg.mxu0
    %961 = vmatpush.msra.mxu0 %v176
    %962 = vmatpush.msra.mxu0 %v168
    %963 = vmatpush.msra.mxu0 %v160
    %964 = vmatpush.msra.mxu0 %v152
    %965 = vmatpush.msra.mxu0 %v144
    %966 = vmatpush.msra.mxu0 %v136
    %967 = vmatpush.msra.mxu0 %v128
    %968 = vmatpush.msra.mxu0 %v120
    %969 = vmatpush.msra.mxu0 %v112
    %970 = vmatpush.msra.mxu0 %v104
    %971 = vmatpush.msra.mxu0 %v96
    %972 = vmatpush.msra.mxu0 %v88
    %973 = vmatpush.msra.mxu0 %v80
    %974 = vmatpush.msra.mxu0 %v72
    %975 = vmatpush.msra.mxu0 %v64
    %976 = vmatpush.msra.mxu0 %v56
    %977 = vmatmul.f32.gmra.mxu0 %v388
    %v978 = vpop.f32.mrf.mxu0
    %v979 = vadd.f32 %v413, %v978
    %980 = vdwg.mxu0
    %981 = vmatpush.msra.mxu0 %v304
    %982 = vmatpush.msra.mxu0 %v296
    %983 = vmatpush.msra.mxu0 %v288
    %984 = vmatpush.msra.mxu0 %v280
    %985 = vmatpush.msra.mxu0 %v272
    %986 = vmatpush.msra.mxu0 %v264
    %987 = vmatpush.msra.mxu0 %v256
    %988 = vmatpush.msra.mxu0 %v248
    %989 = vmatpush.msra.mxu0 %v240
    %990 = vmatpush.msra.mxu0 %v232
    %991 = vmatpush.msra.mxu0 %v224
    %992 = vmatpush.msra.mxu0 %v216
    %993 = vmatpush.msra.mxu0 %v208
    %994 = vmatpush.msra.mxu0 %v200
    %995 = vmatpush.msra.mxu0 %v192
    %996 = vmatpush.msra.mxu0 %v184
    %997 = vmatmul.f32.gmra.mxu0 %v408
    %v998 = vpop.f32.mrf.mxu0
    %v999 = vadd.f32 %v979, %v998
    %1000 = vdwg.mxu0
    %1001 = vmatpush.msra.mxu0 %v177
    %1002 = vmatpush.msra.mxu0 %v169
    %1003 = vmatpush.msra.mxu0 %v161
    %1004 = vmatpush.msra.mxu0 %v153
    %1005 = vmatpush.msra.mxu0 %v145
    %1006 = vmatpush.msra.mxu0 %v137
    %1007 = vmatpush.msra.mxu0 %v129
    %1008 = vmatpush.msra.mxu0 %v121
    %1009 = vmatpush.msra.mxu0 %v113
    %1010 = vmatpush.msra.mxu0 %v105
    %1011 = vmatpush.msra.mxu0 %v97
    %1012 = vmatpush.msra.mxu0 %v89
    %1013 = vmatpush.msra.mxu0 %v81
    %1014 = vmatpush.msra.mxu0 %v73
    %1015 = vmatpush.msra.mxu0 %v65
    %1016 = vmatpush.msra.mxu0 %v57
    %1017 = vmatmul.f32.gmra.mxu0 %v388
    %v1018 = vpop.f32.mrf.mxu0
    %v1019 = vadd.f32 %v413, %v1018
    %1020 = vdwg.mxu0
    %1021 = vmatpush.msra.mxu0 %v305
    %1022 = vmatpush.msra.mxu0 %v297
    %1023 = vmatpush.msra.mxu0 %v289
    %1024 = vmatpush.msra.mxu0 %v281
    %1025 = vmatpush.msra.mxu0 %v273
    %1026 = vmatpush.msra.mxu0 %v265
    %1027 = vmatpush.msra.mxu0 %v257
    %1028 = vmatpush.msra.mxu0 %v249
    %1029 = vmatpush.msra.mxu0 %v241
    %1030 = vmatpush.msra.mxu0 %v233
    %1031 = vmatpush.msra.mxu0 %v225
    %1032 = vmatpush.msra.mxu0 %v217
    %1033 = vmatpush.msra.mxu0 %v209
    %1034 = vmatpush.msra.mxu0 %v201
    %1035 = vmatpush.msra.mxu0 %v193
    %1036 = vmatpush.msra.mxu0 %v185
    %1037 = vmatmul.f32.gmra.mxu0 %v408
    %v1038 = vpop.f32.mrf.mxu0
    %v1039 = vadd.f32 %v1019, %v1038
    %1040 = vdwg.mxu0
    %1041 = vmatpush.msra.mxu0 %v178
    %1042 = vmatpush.msra.mxu0 %v170
    %1043 = vmatpush.msra.mxu0 %v162
    %1044 = vmatpush.msra.mxu0 %v154
    %1045 = vmatpush.msra.mxu0 %v146
    %1046 = vmatpush.msra.mxu0 %v138
    %1047 = vmatpush.msra.mxu0 %v130
    %1048 = vmatpush.msra.mxu0 %v122
    %1049 = vmatpush.msra.mxu0 %v114
    %1050 = vmatpush.msra.mxu0 %v106
    %1051 = vmatpush.msra.mxu0 %v98
    %1052 = vmatpush.msra.mxu0 %v90
    %1053 = vmatpush.msra.mxu0 %v82
    %1054 = vmatpush.msra.mxu0 %v74
    %1055 = vmatpush.msra.mxu0 %v66
    %1056 = vmatpush.msra.mxu0 %v58
    %1057 = vmatmul.f32.gmra.mxu0 %v388
    %v1058 = vpop.f32.mrf.mxu0
    %v1059 = vadd.f32 %v413, %v1058
    %1060 = vdwg.mxu0
    %1061 = vmatpush.msra.mxu0 %v306
    %1062 = vmatpush.msra.mxu0 %v298
    %1063 = vmatpush.msra.mxu0 %v290
    %1064 = vmatpush.msra.mxu0 %v282
    %1065 = vmatpush.msra.mxu0 %v274
    %1066 = vmatpush.msra.mxu0 %v266
    %1067 = vmatpush.msra.mxu0 %v258
    %1068 = vmatpush.msra.mxu0 %v250
    %1069 = vmatpush.msra.mxu0 %v242
    %1070 = vmatpush.msra.mxu0 %v234
    %1071 = vmatpush.msra.mxu0 %v226
    %1072 = vmatpush.msra.mxu0 %v218
    %1073 = vmatpush.msra.mxu0 %v210
    %1074 = vmatpush.msra.mxu0 %v202
    %1075 = vmatpush.msra.mxu0 %v194
    %1076 = vmatpush.msra.mxu0 %v186
    %1077 = vmatmul.f32.gmra.mxu0 %v408
    %v1078 = vpop.f32.mrf.mxu0
    %v1079 = vadd.f32 %v1059, %v1078
    %1080 = vdwg.mxu0
    %v1089 = vrot.slane %v839, 6
    %v1090 = vrot.slane %v879, 4
    %v1091 = vrot.slane %v919, 2
    %v1092 = vrot.slane %v999, 6
    %v1093 = vrot.slane %v1039, 4
    %v1094 = vrot.slane %v1079, 2
    %v1095 = vsel %vm749, %v799, %v1089
    %v1096 = vsel %vm751, %v1090, %v1091
    %v1097 = vsel %vm321, %v1095, %v1096
    %v1098 = vsel %vm749, %v959, %v1092
    %v1099 = vsel %vm751, %v1093, %v1094
    %v1100 = vsel %vm321, %v1098, %v1099
    %s1103 = scalar_lea.vmem [#allocation7], 16
    %1104 = vst [vmem:[%s1103] sm:$0xff] %v1097
    %1105 = vst [vmem:[%s1103 + $0x8] sm:$0xff] %v1100
    // Predicated region
    $region26: #{tpu_custom_call.1} parent=1 // pred_check
      _
    $region27: #{tpu_custom_call.1} parent=1 // pred_check_branch
      %1107 = sbr.rel (0) target = $region29
    $region28: #{tpu_custom_call.1} parent=1 // pred_region
      %1109 = vsyncadd [#allocation4], 0
      %s1110 = sshll.u32 [#allocation7], 4
      %s1111 = int_to_ptr.vmem [resolvable:$true] %s1110
      %s1112 = sshll.u32 %s4, 4
      %s1113 = int_to_ptr.hbm [resolvable:$true] %s1112
      %1118 = dma.vmem_to_hbm [thread:$0]  %s1111, 512, %s1113, [#allocation4], 256, 256, 16
    $region29: #{tpu_custom_call.1} parent=1 // pred_fallthru
      _
    // Predicated region
    $region30: #{tpu_custom_call.1} parent=1 // pred_check
      _
    $region31: #{tpu_custom_call.1} parent=1 // pred_check_branch
      %1120 = sbr.rel (0) target = $region33
    $region32: #{tpu_custom_call.1} parent=1 // pred_region
      %1122 = dma.done [#allocation4], 512
    $region33: #{tpu_custom_call.1} parent=1 // pred_fallthru
      _
    %1123 = vsyncpa [#allocation3], 1
    %1124 = vsyncpa [#allocation6], 1
    %1125 = vsyncpa [#allocation4], 1

</llo_original>
